<compile_context>
chip_gen: v6e
topology: v6e:2x2x1
jax: 0.10.0
libtpu: 0.0.40
codegen_flags: <defaults>
</compile_context>

<pallas_src>
import jax
import jax.numpy as jnp
from jax import lax
from jax.experimental import pallas as pl
from jax.experimental.pallas import tpu as pltpu


def _squash_kernel(x_ref, o_ref):
    # Block view: (C, TILE_HW) -- batch dim squeezed out by the BlockSpec.
    x = x_ref[...]
    xf = x.astype(jnp.float32)
    # Per-lane energy: sum of squares over the channel (sublane) axis.
    eng = jnp.sum(xf * xf, axis=0, keepdims=True)               # (1, TILE_HW) f32
    # eng/(1+eng) * 1/sqrt(eng+1e-8): rsqrt + reciprocal both go to the EUP
    # and avoid the f32 overflow of (1+eng)^2*(eng+1e-8) for huge eng.
    scale = eng * lax.rsqrt(eng + 1e-8) * pl.reciprocal(1.0 + eng, approx=False)
    # Keep x in native dtype; downcast scale instead (smaller bf16 temporaries).
    o_ref[...] = (x * scale.astype(x.dtype)).astype(o_ref.dtype)


def _round_up(v, m):
    return ((v + m - 1) // m) * m


def _sublane_tile(dtype):
    # (8,128) tiling for 4-byte, (16,128) for 2-byte, (32,128) for 1-byte.
    return max(8, 32 // jnp.dtype(dtype).itemsize)


# Generation-agnostic total-footprint target: comfortably under v7x's 64 MiB
# physical VMEM while keeping tiles >= 512 lanes for typical channel counts.
_TOTAL_VMEM_BUDGET = 24 * 1024 * 1024


def _pick_tile_hw(n, c, hw, dtype):
    """Choose a multiple-of-128 lane tile and report its real VMEM footprint."""
    itemsize = jnp.dtype(dtype).itemsize
    c_pad = _round_up(c, _sublane_tile(dtype))   # sublane-padded channel count
    c_pad_f32 = _round_up(c, 8)                  # f32 temp is (8,128)-tiled
    # Per-lane bytes: 2 double-buffered input + 2 output buffers (native dtype)
    # plus one f32 temporary for the squared/energy computation.
    bytes_per_lane = 4 * c_pad * itemsize + c_pad_f32 * 4
    max_lanes = max(128, (_TOTAL_VMEM_BUDGET // bytes_per_lane) // 128 * 128)
    tile_hw = int(min(max_lanes, _round_up(hw, 128)))
    # v7x shards the "parallel" grid across 2 TensorCores: when the batch dim
    # alone can't provide >= 2 grid steps, split HW into at least 2 tiles.
    if n == 1 and hw > 128:
        tile_hw = int(min(tile_hw, _round_up(pl.cdiv(hw, 2), 128)))
    footprint = bytes_per_lane * tile_hw
    return tile_hw, int(footprint)


def squash(x):
    """x: (N, C, H, W) -> (N, C, H, W), same semantics as the torch Squash."""
    n, c, h, w = x.shape
    hw = h * w

    tile_hw, footprint = _pick_tile_hw(n, c, hw, x.dtype)
    grid = (n, pl.cdiv(hw, tile_hw))
    block = (pl.Squeezed(), c, tile_hw)

    # Explicit scoped-VMEM limit derived from the real footprint (+ margin),
    # so tile choice is decoupled from the 16/32 MiB per-generation defaults.
    vmem_limit = max(16 << 20, min(footprint + (4 << 20), 100 << 20))

    x_flat = x.reshape(n, c, hw)  # contiguous reshape: no extra HBM pass

    out_flat = pl.pallas_call(
        _squash_kernel,
        out_shape=jax.ShapeDtypeStruct((n, c, hw), x.dtype),
        grid_spec=pltpu.PrefetchScalarGridSpec(
            num_scalar_prefetch=0,
            grid=grid,
            in_specs=[pl.BlockSpec(block, lambda i, j: (i, 0, j))],
            out_specs=pl.BlockSpec(block, lambda i, j: (i, 0, j)),
        ),
        compiler_params=pltpu.CompilerParams(
            dimension_semantics=("parallel", "parallel"),
            vmem_limit_bytes=vmem_limit,
        ),
    )(x_flat)

    return out_flat.reshape(n, c, h, w)


def _squash_ref(x):
    xf = x.astype(jnp.float32)
    eng = jnp.sum(xf * xf, axis=1, keepdims=True)
    return (eng / (1.0 + eng) * xf / jnp.sqrt(eng + 1e-8)).astype(x.dtype)


if __name__ == "__main__":
    key = jax.random.PRNGKey(0)

    # Small NCHW input consistent with the module's forward.
    x = jax.random.normal(key, (2, 4, 16, 16), dtype=jnp.float32)
    out = jax.block_until_ready(squash(x))
    ref = _squash_ref(x)
    assert out.shape == x.shape and out.dtype == x.dtype
    assert jnp.allclose(out, ref, atol=1e-5, rtol=1e-5)

    # Non-128-aligned spatial size exercises the ragged (masked) final block.
    x2 = jax.random.normal(jax.random.PRNGKey(1), (2, 4, 10, 10), dtype=jnp.float32)
    out2 = jax.block_until_ready(squash(x2))
    ref2 = _squash_ref(x2)
    assert out2.shape == x2.shape
    assert jnp.allclose(out2, ref2, atol=1e-5, rtol=1e-5)

    print("KERNEL_OK")
</pallas_src>

<mosaic_0001>
module attributes {stable_mosaic.version = 11 : i64} {
  func.func @_squash_kernel(%arg0: i32, %arg1: i32, %arg2: memref<1x4x256xf32, #tpu.memory_space<vmem>>, %arg3: memref<1x4x256xf32, #tpu.memory_space<vmem>>) attributes {dimension_semantics = [#tpu.dimension_semantics<parallel>, #tpu.dimension_semantics<parallel>], iteration_bounds = array<i64: 2, 1>, scalar_prefetch = 0 : i64, scratch_operands = 0 : i64, tpu.core_type = #tpu.core_type<tc>, window_params = [{transform_indices = @transform_0, window_bounds = array<i64: 1, 4, 256>}, {transform_indices = @transform_1, window_bounds = array<i64: 1, 4, 256>}]} {
    %c0 = arith.constant 0 : index
    %c0_0 = arith.constant 0 : index
    %c0_1 = arith.constant 0 : index
    %0 = vector.load %arg2[%c0, %c0_0, %c0_1] : memref<1x4x256xf32, #tpu.memory_space<vmem>>, vector<1x4x256xf32>
    %1 = vector.shape_cast %0 : vector<1x4x256xf32> to vector<4x256xf32>
    %2 = arith.mulf %1, %1 : vector<4x256xf32>
    %cst = arith.constant dense<0.000000e+00> : vector<256xf32>
    %3 = vector.multi_reduction <add>, %2, %cst [0] : vector<4x256xf32> to vector<256xf32>
    %4 = vector.shape_cast %3 : vector<256xf32> to vector<1x256xf32>
    %cst_2 = arith.constant 9.99999993E-9 : f32
    %5 = vector.broadcast %cst_2 : f32 to vector<1x256xf32>
    %6 = arith.addf %4, %5 : vector<1x256xf32>
    %7 = math.rsqrt %6 : vector<1x256xf32>
    %8 = arith.mulf %4, %7 : vector<1x256xf32>
    %cst_3 = arith.constant 1.000000e+00 : f32
    %9 = vector.broadcast %cst_3 : f32 to vector<1x256xf32>
    %10 = arith.addf %9, %4 : vector<1x256xf32>
    %11 = tpu.reciprocal %10 : vector<1x256xf32> -> vector<1x256xf32>
    %12 = arith.mulf %8, %11 : vector<1x256xf32>
    %13 = vector.broadcast %12 : vector<1x256xf32> to vector<4x256xf32>
    %14 = arith.mulf %1, %13 : vector<4x256xf32>
    %c0_4 = arith.constant 0 : index
    %c0_5 = arith.constant 0 : index
    %c0_6 = arith.constant 0 : index
    %15 = vector.load %arg3[%c0_4, %c0_5, %c0_6] : memref<1x4x256xf32, #tpu.memory_space<vmem>>, vector<1x4x256xf32>
    %16 = vector.shape_cast %15 : vector<1x4x256xf32> to vector<4x256xf32>
    %17 = vector.shape_cast %14 : vector<4x256xf32> to vector<1x4x256xf32>
    tpu.vector_store %arg3[%c0_4, %c0_5, %c0_6], %17 {strides = array<i32>} : memref<1x4x256xf32, #tpu.memory_space<vmem>>, vector<1x4x256xf32>,
    return
  }
  func.func @transform_0(%arg0: i32, %arg1: i32) -> (i32, i32, i32) {
    %c0_i32 = arith.constant 0 : i32
    %c0_i32_0 = arith.constant 0 : i32
    return %arg0, %c0_i32, %arg1 : i32, i32, i32
  }
  func.func @transform_1(%arg0: i32, %arg1: i32) -> (i32, i32, i32) {
    %c0_i32 = arith.constant 0 : i32
    %c0_i32_0 = arith.constant 0 : i32
    return %arg0, %c0_i32, %arg1 : i32, i32, i32
  }
}

</mosaic_0001>

<llo_original>
// kernel: tpu_custom_call.1
$region0: #{tpu_custom_call.1}
  #allocation0 [shape = 'u32[]', space=smem, size = 0x4, offset = 0x4, fixed_abs, tag = 'smem constant byte address 0x4 - core index']
  #allocation1 [shape = 'u32[144,128]{1,0:T(1,128)}', space=vmem, size = 0x12000, scoped, tag = 'internal scratch']
  %s0 = inlined_call_operand.hbm [shape: f32[2,4,256], index: 0, kind: input, shape index: {}]
  %s1 = inlined_call_operand.hbm [shape: f32[2,4,256], index: 1, kind: output, shape index: {}]
  %s2 = sld [smem:[#allocation0]]
  $region41: #{tpu_custom_call.1} parent=0
    _
  %s4 = ssub.s32 1, %s2
  %s5 = scalar_select 0, %s4, %s2
  $region1: #{tpu_custom_call.1} parent=0
    #allocation2 [shape = 'u8[8192]{0}', space=vmem, size = 0x2000, scoped, tag = 'input window, operand 0']
    #allocation3 [shape = 's32[2]{0}', space=sflag, size = 0x8, scoped, tag = 'scoped memory for tpu_custom_call.1']
    #allocation4 [shape = 's32[2]{0}', space=sflag, size = 0x8, scoped, tag = 'scoped memory for tpu_custom_call.1']
    #allocation5 [shape = 'u8[8192]{0}', space=vmem, size = 0x2000, scoped, tag = 'output window, operand 0']
    %6 = vsyncpa [#allocation3], 0
    %s7 = scalar_lea.sflag [#allocation3], 1
    %8 = vsyncpa %s7, 0
    %9 = vsyncpa [#allocation4], 0
    %s10 = scalar_lea.sflag [#allocation4], 1
    %11 = vsyncpa %s10, 0
    loop: start=0, step=1, limit=4
    $region2: #{tpu_custom_call.1} parent=1 // loop_pre_header
      _
    $region3: #{tpu_custom_call.1} parent=1 // loop_header
      %s13 = sphi 0, %s17
      %p14 = scmp.ge.s32.totalorder %s13, 4
      %s20 = sphi 0, %s32
      %s21 = sphi 0, %s28
      %s22 = sphi 0, %s20
      %s23 = sphi 0, %s21
      %s24 = sphi 0, %s22
      %s25 = sphi 0, %s23
      %s37 = sphi 0, %s39
      %s40 = sphi 0, %s37
      %s41 = sphi 0, %s40
      %s57 = sphi 0, %s41
      %s65 = sphi 0, %s67
      %s68 = sphi 0, %s65
      %s69 = sphi 0, %s68
      %s85 = sphi 0, %s69
    $region4: #{tpu_custom_call.1} parent=1 // loop_header_branch
      %16 = sbr.rel (%p14) target = $region8
    $region5: #{tpu_custom_call.1} parent=1 // loop_body
      %s18 = ssub.s32 %s13, 1
      %s19 = ssub.s32 %s13, 2
      %s26 = sadd.s32 1, %s21
      %p27 = scmp.ge.s32.totalorder %s26, 1
      %s28 = scalar_select %p27, 0, %s26
      %s29 = sadd.s32 1, %s20
      %s30 = scalar_select %p27, %s29, %s20
      %p31 = scmp.ge.s32.totalorder %s30, 2
      %s32 = scalar_select %p31, 0, %s30
      %s33 = ssub.s32 %s20, %s32
      %s34 = ssub.s32 %s21, %s28
      %s35 = sor.u32 %s33, %s34
      %p36 = scmp.eq.s32.totalorder %s35, 0
      %s38 = sadd.s32 %s37, 1
      %s39 = scalar_select %p36, %s37, %s38
      %p42 = pneg %p36
      %p43 = scmp.eq.s32.totalorder %s13, 1
      %p44 = por %p42, %p43
      %p45 = scmp.ne.s32.totalorder %s37, %s40
      %p46 = scmp.eq.s32.totalorder %s13, 0
      %p47 = por %p45, %p46
      %p48 = scmp.ne.s32.totalorder %s37, %s40
      %p49 = scmp.eq.s32.totalorder %s18, 1
      %p50 = por %p48, %p49
      %p51 = scmp.ne.s32.totalorder %s40, %s41
      %p52 = scmp.eq.s32.totalorder %s18, 0
      %p53 = por %p51, %p52
      %p54 = scmp.ne.s32.totalorder %s40, %s41
      %p55 = scmp.eq.s32.totalorder %s19, 1
      %p56 = por %p54, %p55
      %p58 = scmp.ne.s32.totalorder %s41, %s57
      %p59 = scmp.eq.s32.totalorder %s19, 0
      %p60 = por %p58, %p59
      %s61 = ssub.s32 %s20, %s32
      %s62 = ssub.s32 %s21, %s28
      %s63 = sor.u32 %s61, %s62
      %p64 = scmp.eq.s32.totalorder %s63, 0
      %s66 = sadd.s32 %s65, 1
      %s67 = scalar_select %p64, %s65, %s66
      %p70 = pneg %p64
      %p71 = scmp.eq.s32.totalorder %s13, 1
      %p72 = por %p70, %p71
      %p73 = scmp.ne.s32.totalorder %s65, %s68
      %p74 = scmp.eq.s32.totalorder %s13, 0
      %p75 = por %p73, %p74
      %p76 = scmp.ne.s32.totalorder %s65, %s68
      %p77 = scmp.eq.s32.totalorder %s18, 1
      %p78 = por %p76, %p77
      %p79 = scmp.ne.s32.totalorder %s68, %s69
      %p80 = scmp.eq.s32.totalorder %s18, 0
      %p81 = por %p79, %p80
      %p82 = scmp.ne.s32.totalorder %s68, %s69
      %p83 = scmp.eq.s32.totalorder %s19, 1
      %p84 = por %p82, %p83
      %p86 = scmp.ne.s32.totalorder %s69, %s85
      %p87 = scmp.eq.s32.totalorder %s19, 0
      %p88 = por %p86, %p87
      %p89 = scmp.le.s32.totalorder 1, %s13
      %p90 = scmp.lt.s32.totalorder %s13, 3
      %p91 = pnand %p89, %p90
      %p92 = pneg %p91
      // Predicated region
      $region9: #{tpu_custom_call.1} parent=5 // pred_check
        _
      $region10: #{tpu_custom_call.1} parent=5 // pred_check_branch
        %94 = sbr.rel (%p91) target = $region12
      $region11: #{tpu_custom_call.1} parent=5 // pred_region
        %s95 = ssub.s32 %s13, 1
      $region12: #{tpu_custom_call.1} parent=5 // pred_fallthru
        _
      %p96 = scmp.lt.s32.totalorder %s13, 2
      // Predicated region
      $region13: #{tpu_custom_call.1} parent=5 // pred_check
        %p97 = pneg %p96
      $region14: #{tpu_custom_call.1} parent=5 // pred_check_branch
        %99 = sbr.rel (%p97) target = $region16
      $region15: #{tpu_custom_call.1} parent=5 // pred_region
        // Predicated region
        $region17: #{tpu_custom_call.1} parent=15 // pred_check
          %p100 = pneg %p47
        $region18: #{tpu_custom_call.1} parent=15 // pred_check_branch
          %102 = sbr.rel (%p100) target = $region20
        $region19: #{tpu_custom_call.1} parent=15 // pred_region
          %s103 = sand.u32 %s37, 1
          %s104 = scalar_lea.sflag [#allocation3], %s103
          %s105 = sand.u32 %s37, 1
          %s106 = smul.addr %s105, 8
          %s107 = scalar_lea.vmem [#allocation2], %s106
          %s108 = smul.u32 2, %s21
          %s110 = ssub.s32 128, 128
          %111 = vsyncadd %s104, %s110
          %s112 = smul.addr %s20, 2
          %s113 = sadd.s32 %s108, %s112
          %s114 = smul.addr %s113, 64
          %s115 = scalar_lea.hbm %s0, %s114
          %s117 = sshll.u32 %s107, 4
          %s118 = int_to_ptr.vmem [resolvable:$true] %s117
          %120 = dma.hbm_to_vmem [thread:$0]  %s115, 128, %s118, %s104
        $region20: #{tpu_custom_call.1} parent=15 // pred_fallthru
          _
      $region16: #{tpu_custom_call.1} parent=5 // pred_fallthru
        _
      %p121 = scmp.le.s32.totalorder 1, %s13
      %p122 = scmp.lt.s32.totalorder %s13, 3
      %p123 = pnand %p121, %p122
      %p124 = pneg %p123
      // Predicated region
      $region21: #{tpu_custom_call.1} parent=5 // pred_check
        _
      $region22: #{tpu_custom_call.1} parent=5 // pred_check_branch
        %126 = sbr.rel (%p123) target = $region24
      $region23: #{tpu_custom_call.1} parent=5 // pred_region
        %s127 = ssub.s32 %s13, 1
        %s128 = sand.u32 %s40, 1
        %s129 = scalar_lea.sflag [#allocation3], %s128
        %s130 = sand.u32 %s40, 1
        %s131 = smul.addr %s130, 8
        %s132 = scalar_lea.vmem [#allocation2], %s131
        // Predicated region
        $region25: #{tpu_custom_call.1} parent=23 // pred_check
          %p133 = pneg %p53
        $region26: #{tpu_custom_call.1} parent=23 // pred_check_branch
          %135 = sbr.rel (%p133) target = $region28
        $region27: #{tpu_custom_call.1} parent=23 // pred_region
          %136 = dma.done %s129, 128
        $region28: #{tpu_custom_call.1} parent=23 // pred_fallthru
          _
        %s137 = sand.u32 %s40, 1
        %s138 = scalar_lea.sflag [#allocation3], %s137
        %s139 = sand.u32 %s40, 1
        %s140 = smul.addr %s139, 8
        %s141 = scalar_lea.vmem [#allocation2], %s140
        %p142 = pneg %p53
        %p143 = pneg %p50
        %p144 = pneg %p81
        %p145 = pneg %p78
        %s146 = sand.u32 %s68, 1
        %s147 = scalar_lea.sflag [#allocation4], %s146
        %s148 = sand.u32 %s68, 1
        %s149 = smul.addr %s148, 8
        %s150 = scalar_lea.vmem [#allocation5], %s149
        %s151 = smul.u32 2, %s23
        %s152 = smul.u32 2, %s23
        %v153 = vld [vmem:[%s132] sm:$0xff]
        %v154 = vmul.f32 %v153, %v153
        %v156 = vcombine.high %v154, %v154
        %vm158 = vcmask 1043456
        %v159 = vsel %vm158, %v154, 0.0
        %v160 = vrot.slane %v159, 4
        %v161 = vadd.f32 %v159, %v160
        %v162 = vrot.slane %v161, 2
        %v163 = vadd.f32 %v161, %v162
        %v164 = vrot.slane %v163, 1
        %v165 = vadd.f32 %v163, %v164
        %v166 = vsel %vm158, %v156, 0.0
        %v167 = vrot.slane %v166, 4
        %v168 = vadd.f32 %v166, %v167
        %v169 = vrot.slane %v168, 2
        %v170 = vadd.f32 %v168, %v169
        %v171 = vrot.slane %v170, 1
        %v172 = vadd.f32 %v170, %v171
        %v173 = vadd.f32 %v165, 1e-08
        %v174 = vadd.f32 %v172, 1e-08
        %v175 = vrsqrt.pop %v173
        %v176 = vrsqrt.pop %v174
        %v177 = vmul.f32 %v165, %v175
        %v178 = vmul.f32 %v172, %v176
        %v179 = vadd.f32 %v165, 1.0
        %v180 = vadd.f32 %v172, 1.0
        %v181 = vrcp.pop %v179
        %v182 = vrcp.pop %v180
        %v183 = vmul.f32 %v177, %v181
        %v184 = vmul.f32 %v178, %v182
        %v187 = vcombine.low %v183, %v184
        %v189 = vmul.f32 %v153, %v187
        %190 = vst [vmem:[%s150] sm:$0xff] %v189
        %s191 = sand.u32 %s68, 1
        %s192 = scalar_lea.sflag [#allocation4], %s191
        %s193 = sand.u32 %s68, 1
        %s194 = smul.addr %s193, 8
        %s195 = scalar_lea.vmem [#allocation5], %s194
        // Predicated region
        $region29: #{tpu_custom_call.1} parent=23 // pred_check
          %p196 = pneg %p78
        $region30: #{tpu_custom_call.1} parent=23 // pred_check_branch
          %198 = sbr.rel (%p196) target = $region32
        $region31: #{tpu_custom_call.1} parent=23 // pred_region
          %s199 = smul.u32 2, %s23
          %s201 = ssub.s32 128, 128
          %202 = vsyncadd %s192, %s201
          %s203 = smul.addr %s22, 2
          %s204 = sadd.s32 %s199, %s203
          %s205 = smul.addr %s204, 64
          %s206 = scalar_lea.hbm %s1, %s205
          %s208 = sshll.u32 %s195, 4
          %s209 = int_to_ptr.vmem [resolvable:$true] %s208
          %211 = dma.vmem_to_hbm [thread:$0]  %s209, 128, %s206, %s192
        $region32: #{tpu_custom_call.1} parent=23 // pred_fallthru
          _
      $region24: #{tpu_custom_call.1} parent=5 // pred_fallthru
        _
      %p212 = scmp.le.s32.totalorder 2, %s13
      // Predicated region
      $region33: #{tpu_custom_call.1} parent=5 // pred_check
        %p213 = pneg %p212
      $region34: #{tpu_custom_call.1} parent=5 // pred_check_branch
        %215 = sbr.rel (%p213) target = $region36
      $region35: #{tpu_custom_call.1} parent=5 // pred_region
        %s216 = ssub.s32 %s13, 2
        // Predicated region
        $region37: #{tpu_custom_call.1} parent=35 // pred_check
          %p217 = pneg %p84
        $region38: #{tpu_custom_call.1} parent=35 // pred_check_branch
          %219 = sbr.rel (%p217) target = $region40
        $region39: #{tpu_custom_call.1} parent=35 // pred_region
          %s220 = sand.u32 %s69, 1
          %s221 = scalar_lea.sflag [#allocation4], %s220
          %s222 = sand.u32 %s69, 1
          %s223 = smul.addr %s222, 8
          %s224 = scalar_lea.vmem [#allocation5], %s223
          %225 = dma.done %s221, 128
        $region40: #{tpu_custom_call.1} parent=35 // pred_fallthru
          _
      $region36: #{tpu_custom_call.1} parent=5 // pred_fallthru
        _
    $region6: #{tpu_custom_call.1} parent=1 // loop_footer
      %s17 = sadd.s32 1, %s13
    $region7: #{tpu_custom_call.1} parent=1 // loop_footer_branch
      %12 = sbr.rel target = $region3
    $region8: #{tpu_custom_call.1} parent=1 // loop_exit
      _
    %226 = vsyncpa [#allocation3], 1
    %s227 = scalar_lea.sflag [#allocation3], 1
    %228 = vsyncpa %s227, 1
    %229 = vsyncpa [#allocation4], 1
    %s230 = scalar_lea.sflag [#allocation4], 1
    %231 = vsyncpa %s230, 1

</llo_original>
